<compile_context>
chip_gen: v7x
topology: tpu7x:2x2x1
jax: 0.10.0
libtpu: 0.0.40
codegen_flags: <defaults>
</compile_context>

<pallas_src>
import functools

import jax
import jax.numpy as jnp
import numpy as np
from jax.experimental import pallas as pl
from jax.experimental.pallas import tpu as pltpu

EPS = 1e-5          # BatchNorm1d default eps
NEG_SLOPE = 0.01    # LeakyReLU default negative_slope


def _sigmoid(x):
    # tanh-based sigmoid: one EUP transcendental, no VPU divide on the serial GRU path.
    return 0.5 * jnp.tanh(0.5 * x) + 0.5


def _round_up(a, b):
    return -(-a // b) * b


# --------------------- pass 1: global BatchNorm1d(T) batch statistics ---------------------
def bn_stats_kernel(x_ref, shift_ref, sum_ref, sq_ref):
    """Shifted sums of x over the stock axis (sublane-only reduction, lane-dense accumulators).

    x_ref:     (tn, T*C) tile of x viewed as (N, T*C)
    shift_ref: (1, T*C)  per-column shift (first stock row) -> cancellation-free variance
    sum_ref / sq_ref: (1, T*C) running sum(d) / sum(d*d) with d = x - shift, accumulated
                      across the stock grid (resident output block, "arbitrary" axis).
    """
    @pl.when(pl.program_id(0) == 0)
    def _():
        sum_ref[...] = jnp.zeros_like(sum_ref)
        sq_ref[...] = jnp.zeros_like(sq_ref)

    d = x_ref[...] - shift_ref[...]                       # sublane broadcast, lane-dense
    sum_ref[...] += jnp.sum(d, axis=0, keepdims=True)
    sq_ref[...] += jnp.sum(d * d, axis=0, keepdims=True)


# --------------- pass 2: (BN folded) Linear + LeakyReLU + GRU + temporal weighting ----------
def stock_feature_kernel(wt_ref,                                    # scalar prefetch (SMEM)
                         x_ref, wbig_ref, bbig_ref, wihbig_ref, bih_ref, whht_ref, bhhn_ref,
                         out_ref, *, T, H, mxu_dtype):
    """One stock tile, with the stock index on the lane (minor) axis everywhere.

    x_ref      (T*C, tn)    wbig_ref   (T*H, T*C)    bbig_ref (T*H, 1)
    wihbig_ref (T*3H, T*H)  bih_ref    (T*3H, 1)     whht_ref (3H, H)   bhhn_ref (H, 1)
    out_ref    (H, tn)
    """
    TN = x_ref.shape[1]
    G = 3 * H

    # BN + Linear(C->H) for all T steps: one lane-dense MXU matmul, K = T*C.
    y = jnp.dot(wbig_ref[...].astype(mxu_dtype), x_ref[...].astype(mxu_dtype),
                preferred_element_type=jnp.float32) + bbig_ref[...]          # (T*H, tn)
    y = jnp.where(y > 0, y, NEG_SLOPE * y)                                   # LeakyReLU

    # GRU input projection for all T steps (block-diagonal wih^T), hoisted off the serial path.
    gx = jnp.dot(wihbig_ref[...].astype(mxu_dtype), y.astype(mxu_dtype),
                 preferred_element_type=jnp.float32) + bih_ref[...]          # (T*3H, tn)

    whht = whht_ref[...].astype(mxu_dtype)                                   # (3H, H)
    bhh_n = jnp.broadcast_to(bhhn_ref[...], (H, TN))                         # hoisted broadcast

    # t = 0: h_prev == 0, so the hidden-state matmul vanishes -- skip it.
    g0 = gx[0:G]
    rz = _sigmoid(g0[0:2 * H])                            # fused r|z sigmoid, lane-dense
    n = jnp.tanh(g0[2 * H:G] + rz[0:H] * bhh_n)
    h = (1.0 - rz[H:2 * H]) * n
    acc = wt_ref[0] * h                                   # out.permute(0,2,1) @ w, on the fly

    # T is small and static -> unrolled serial recurrence (the latency-critical path).
    for t in range(1, T):
        gt = gx[t * G:(t + 1) * G]                        # aligned sublane slice (3H, tn)
        gh = jnp.dot(whht, h.astype(mxu_dtype), preferred_element_type=jnp.float32)
        rz = _sigmoid(gt[0:2 * H] + gh[0:2 * H])
        r = rz[0:H]
        z = rz[H:2 * H]
        n = jnp.tanh(gt[2 * H:G] + r * (gh[2 * H:G] + bhh_n))
        h = (1.0 - z) * n + z * h
        acc = acc + wt_ref[t] * h

    out_ref[...] = acc.astype(out_ref.dtype)


def stock_feature_extractor(x, params, *, tile_n=2048, mxu_dtype=jnp.float32,
                            vmem_limit_bytes=48 * 1024 * 1024):
    """Forward pass of StockFeatureExtractor (training-mode BatchNorm).  x: (N, T, C) -> (N, H)."""
    N, T, C = x.shape
    H = params["wlin"].shape[1]
    x = x.astype(jnp.float32)
    TC = T * C

    # ---- stock-axis tiling: stock axis is the lane axis in pass 2 -> tiles multiple of 128 ----
    tn = min(_round_up(tile_n, 128), _round_up(N, 128))
    n_pad = _round_up(N, tn)
    grid_n = n_pad // tn
    pad = n_pad - N

    x2d = x.reshape(N, TC)                                # free view, lane-dense minor dim
    x2d_p = x2d if pad == 0 else jnp.pad(x2d, ((0, pad), (0, 0)))
    shift_row = x2d[0:1, :]                               # per-column shift for pass 1

    # ---- pass 1: BN batch statistics over ALL stocks (shifted one-pass moments) ----
    sd, sq = pl.pallas_call(
        bn_stats_kernel,
        out_shape=(jax.ShapeDtypeStruct((1, TC), jnp.float32),
                   jax.ShapeDtypeStruct((1, TC), jnp.float32)),
        grid=(grid_n,),
        in_specs=[pl.BlockSpec((tn, TC), lambda i: (i, 0)),
                  pl.BlockSpec((1, TC), lambda i: (0, 0))],
        out_specs=(pl.BlockSpec((1, TC), lambda i: (0, 0)),
                   pl.BlockSpec((1, TC), lambda i: (0, 0))),
        compiler_params=pltpu.CompilerParams(dimension_semantics=("arbitrary",)),
    )(x2d_p, shift_row)

    # Remove the zero-padded rows' contribution exactly (each padded row contributed d = -shift).
    s = shift_row
    sd = sd + pad * s
    sq = sq - pad * (s * s)
    # Combine per-column shifted moments into per-time-step mean/var over (stocks, chars):
    #   x - mean_t = (x - s_c) + (s_c - mean_t)   -> no large-square cancellation.
    cnt = float(N * C)
    sd_tc = sd.reshape(T, C)
    sq_tc = sq.reshape(T, C)
    s_tc = s.reshape(T, C)
    mean = sd_tc.sum(axis=1) / cnt + s_tc.mean(axis=1)                        # (T,)
    off = s_tc - mean[:, None]
    var = jnp.maximum((sq_tc + 2.0 * off * sd_tc + N * off * off).sum(axis=1) / cnt, 0.0)

    gamma = params["gamma"].reshape(T).astype(jnp.float32)
    beta = params["beta"].reshape(T).astype(jnp.float32)
    scale = gamma * jax.lax.rsqrt(var + EPS)                                  # (T,)
    shift = beta - mean * scale                                               # (T,)

    # ---- fold BN into the Linear: block-diagonal (T*H, T*C) weight + (T*H, 1) bias column ----
    wlin = params["wlin"].astype(jnp.float32)               # (C, H)
    blin = params["blin"].reshape(H).astype(jnp.float32)
    eye_t = jnp.eye(T, dtype=jnp.float32)
    blocks = scale[:, None, None] * wlin.T[None]                              # (T, H, C)
    wbig = (eye_t[:, None, :, None] * blocks[:, :, None, :]).reshape(T * H, TC)
    bbig = (blin[None, :] + shift[:, None] * wlin.sum(axis=0)[None, :]).reshape(T * H, 1)

    # ---- GRU weights: block-diag input projection; fold r/z hidden bias into the input bias ----
    wih = params["wih"].astype(jnp.float32)                  # (H, 3H), gate order r|z|n
    whh = params["whh"].astype(jnp.float32)                  # (H, 3H)
    bih = params["bih"].reshape(3 * H).astype(jnp.float32)
    bhh = params["bhh"].reshape(3 * H).astype(jnp.float32)
    bih_f = bih + jnp.concatenate([bhh[:2 * H], jnp.zeros((H,), jnp.float32)])
    wihbig = (eye_t[:, None, :, None] * wih.T[None, :, None, :]).reshape(T * 3 * H, T * H)
    bih_col = jnp.tile(bih_f, T).reshape(T * 3 * H, 1)
    whht = whh.T                                             # (3H, H)
    bhhn_col = bhh[2 * H:].reshape(H, 1)
    wt = params["w"].astype(jnp.float32)                     # (T,)

    xT = x2d_p.T                                             # (T*C, n_pad): stocks on lanes

    grid_spec = pltpu.PrefetchScalarGridSpec(
        num_scalar_prefetch=1,                               # temporal weights -> SMEM
        grid=(grid_n,),
        in_specs=[
            pl.BlockSpec((TC, tn), lambda i, *_: (0, i)),            # x tile (lane-dense DMA)
            pl.BlockSpec((T * H, TC), lambda i, *_: (0, 0)),         # BN-folded block-diag W
            pl.BlockSpec((T * H, 1), lambda i, *_: (0, 0)),          # its bias column
            pl.BlockSpec((T * 3 * H, T * H), lambda i, *_: (0, 0)),  # block-diag wih^T
            pl.BlockSpec((T * 3 * H, 1), lambda i, *_: (0, 0)),      # bih (+ folded bhh_r/z)
            pl.BlockSpec((3 * H, H), lambda i, *_: (0, 0)),          # whh^T
            pl.BlockSpec((H, 1), lambda i, *_: (0, 0)),              # bhh_n
        ],
        out_specs=pl.BlockSpec((H, tn), lambda i, *_: (0, i)),       # lane-dense output store
    )
    out = pl.pallas_call(
        functools.partial(stock_feature_kernel, T=T, H=H, mxu_dtype=mxu_dtype),
        out_shape=jax.ShapeDtypeStruct((H, n_pad), jnp.float32),
        grid_spec=grid_spec,
        compiler_params=pltpu.CompilerParams(
            dimension_semantics=("parallel",),               # shard stock tiles across TCs
            vmem_limit_bytes=vmem_limit_bytes),              # default scoped limit is 16/32 MiB
    )(wt, xT, wbig, bbig, wihbig, bih_col, whht, bhhn_col)

    return out[:, :N].T                                      # (N, H)


def reference(x, params):
    """Pure-JAX reference mirroring the PyTorch forward (for correctness check)."""
    N, T, C = x.shape
    H = params["wlin"].shape[1]
    mean = jnp.mean(x, axis=(0, 2), keepdims=True)
    var = jnp.mean((x - mean) ** 2, axis=(0, 2), keepdims=True)
    xn = (x - mean) / jnp.sqrt(var + EPS) * params["gamma"] + params["beta"]
    y = xn @ params["wlin"] + params["blin"]
    y = jnp.where(y > 0, y, NEG_SLOPE * y)
    h = jnp.zeros((N, H), jnp.float32)
    outs = []
    for t in range(T):
        gx = y[:, t, :] @ params["wih"] + params["bih"]
        gh = h @ params["whh"] + params["bhh"]
        r = jax.nn.sigmoid(gx[:, 0:H] + gh[:, 0:H])
        z = jax.nn.sigmoid(gx[:, H:2 * H] + gh[:, H:2 * H])
        n = jnp.tanh(gx[:, 2 * H:3 * H] + r * gh[:, 2 * H:3 * H])
        h = (1.0 - z) * n + z * h
        outs.append(h)
    out = jnp.stack(outs, axis=1)                 # (N, T, H)
    return jnp.einsum("nth,t->nh", out, params["w"])


if __name__ == "__main__":
    N, T, C, H = 8, 8, 16, 32      # stocks, time_length, characteristics, hidden  (T*C = 128)
    key = jax.random.PRNGKey(0)
    ks = jax.random.split(key, 10)

    def make_params(T, C, H):
        return dict(
            gamma=(1.0 + 0.1 * jax.random.normal(ks[1], (1, T, 1))).astype(jnp.float32),
            beta=(0.1 * jax.random.normal(ks[2], (1, T, 1))).astype(jnp.float32),
            wlin=(jax.random.normal(ks[3], (C, H)) / jnp.sqrt(C)).astype(jnp.float32),     # Linear W^T
            blin=(0.1 * jax.random.normal(ks[4], (1, H))).astype(jnp.float32),
            wih=(jax.random.normal(ks[5], (H, 3 * H)) / jnp.sqrt(H)).astype(jnp.float32),  # GRU W_ih^T (r|z|n)
            bih=(0.1 * jax.random.normal(ks[6], (1, 3 * H))).astype(jnp.float32),
            whh=(jax.random.normal(ks[7], (H, 3 * H)) / jnp.sqrt(H)).astype(jnp.float32),  # GRU W_hh^T (r|z|n)
            bhh=(0.1 * jax.random.normal(ks[8], (1, 3 * H))).astype(jnp.float32),
            w=jax.random.uniform(ks[9], (T,), jnp.float32),                                # temporal weights
        )

    params = make_params(T, C, H)

    # Single-tile case (f32 MXU path, tight tolerance).
    x = jax.random.normal(ks[0], (N, T, C), jnp.float32)
    e = stock_feature_extractor(x, params)
    jax.block_until_ready(e)
    assert e.shape == (N, H)
    np.testing.assert_allclose(np.asarray(e), np.asarray(reference(x, params)),
                               rtol=1e-4, atol=1e-4)

    # Multi-tile case: exercises the N-grid, tail padding (and its stats correction), and the
    # cross-tile shifted-sum BN accumulation.
    N2 = 300
    x2 = jax.random.normal(ks[0], (N2, T, C), jnp.float32)
    e2 = stock_feature_extractor(x2, params, tile_n=128)     # grid of 3 stock tiles (pad to 384)
    jax.block_until_ready(e2)
    assert e2.shape == (N2, H)
    np.testing.assert_allclose(np.asarray(e2), np.asarray(reference(x2, params)),
                               rtol=1e-4, atol=1e-4)

    # bf16 MXU-operand path (v5e/v6e/v7x cadence option): smoke test at loose tolerance.
    e3 = stock_feature_extractor(x, params, mxu_dtype=jnp.bfloat16)
    jax.block_until_ready(e3)
    assert bool(jnp.all(jnp.isfinite(e3)))
    np.testing.assert_allclose(np.asarray(e3), np.asarray(reference(x, params)),
                               rtol=0.1, atol=0.1)

    print("KERNEL_OK")
</pallas_src>

<mosaic_0001>
module attributes {stable_mosaic.version = 11 : i64} {
  func.func @bn_stats_kernel(%arg0: i32, %arg1: memref<128x128xf32, #tpu.memory_space<vmem>>, %arg2: memref<1x128xf32, #tpu.memory_space<vmem>>, %arg3: memref<1x128xf32, #tpu.memory_space<vmem>>, %arg4: memref<1x128xf32, #tpu.memory_space<vmem>>) attributes {dimension_semantics = [#tpu.dimension_semantics<arbitrary>], iteration_bounds = array<i64: 1>, scalar_prefetch = 0 : i64, scratch_operands = 0 : i64, tpu.core_type = #tpu.core_type<tc>, window_params = [{transform_indices = @transform_0, window_bounds = array<i64: 128, 128>}, {pipeline_mode = #tpu.pipeline_mode<synchronous>, transform_indices = @transform_1, window_bounds = array<i64: 1, 128>}, {pipeline_mode = #tpu.pipeline_mode<synchronous>, transform_indices = @transform_2, window_bounds = array<i64: 1, 128>}, {pipeline_mode = #tpu.pipeline_mode<synchronous>, transform_indices = @transform_3, window_bounds = array<i64: 1, 128>}]} {
    %c0_i32 = arith.constant 0 : i32
    %0 = arith.cmpi eq, %arg0, %c0_i32 : i32
    %1 = arith.extui %0 : i1 to i32
    %c0_i32_0 = arith.constant 0 : i32
    %2 = arith.cmpi ne, %1, %c0_i32_0 : i32
    scf.if %2 {
      %cst_13 = arith.constant 0.000000e+00 : f32
      %18 = vector.broadcast %cst_13 : f32 to vector<1x128xf32>
      %c0_14 = arith.constant 0 : index
      %c0_15 = arith.constant 0 : index
      %19 = vector.load %arg3[%c0_14, %c0_15] : memref<1x128xf32, #tpu.memory_space<vmem>>, vector<1x128xf32>
      tpu.vector_store %arg3[%c0_14, %c0_15], %18 {strides = array<i32>} : memref<1x128xf32, #tpu.memory_space<vmem>>, vector<1x128xf32>,
      %cst_16 = arith.constant 0.000000e+00 : f32
      %20 = vector.broadcast %cst_16 : f32 to vector<1x128xf32>
      %c0_17 = arith.constant 0 : index
      %c0_18 = arith.constant 0 : index
      %21 = vector.load %arg4[%c0_17, %c0_18] : memref<1x128xf32, #tpu.memory_space<vmem>>, vector<1x128xf32>
      tpu.vector_store %arg4[%c0_17, %c0_18], %20 {strides = array<i32>} : memref<1x128xf32, #tpu.memory_space<vmem>>, vector<1x128xf32>,
    } else {
    }
    %c0 = arith.constant 0 : index
    %c0_1 = arith.constant 0 : index
    %3 = vector.load %arg1[%c0, %c0_1] : memref<128x128xf32, #tpu.memory_space<vmem>>, vector<128x128xf32>
    %c0_2 = arith.constant 0 : index
    %c0_3 = arith.constant 0 : index
    %4 = vector.load %arg2[%c0_2, %c0_3] : memref<1x128xf32, #tpu.memory_space<vmem>>, vector<1x128xf32>
    %5 = vector.broadcast %4 : vector<1x128xf32> to vector<128x128xf32>
    %6 = arith.subf %3, %5 : vector<128x128xf32>
    %c0_4 = arith.constant 0 : index
    %c0_5 = arith.constant 0 : index
    %7 = vector.load %arg3[%c0_4, %c0_5] : memref<1x128xf32, #tpu.memory_space<vmem>>, vector<1x128xf32>
    %cst = arith.constant dense<0.000000e+00> : vector<128xf32>
    %8 = vector.multi_reduction <add>, %6, %cst [0] : vector<128x128xf32> to vector<128xf32>
    %9 = vector.shape_cast %8 : vector<128xf32> to vector<1x128xf32>
    %10 = arith.addf %7, %9 : vector<1x128xf32>
    %c0_6 = arith.constant 0 : index
    %c0_7 = arith.constant 0 : index
    %11 = vector.load %arg3[%c0_6, %c0_7] : memref<1x128xf32, #tpu.memory_space<vmem>>, vector<1x128xf32>
    tpu.vector_store %arg3[%c0_6, %c0_7], %10 {strides = array<i32>} : memref<1x128xf32, #tpu.memory_space<vmem>>, vector<1x128xf32>,
    %c0_8 = arith.constant 0 : index
    %c0_9 = arith.constant 0 : index
    %12 = vector.load %arg4[%c0_8, %c0_9] : memref<1x128xf32, #tpu.memory_space<vmem>>, vector<1x128xf32>
    %13 = arith.mulf %6, %6 : vector<128x128xf32>
    %cst_10 = arith.constant dense<0.000000e+00> : vector<128xf32>
    %14 = vector.multi_reduction <add>, %13, %cst_10 [0] : vector<128x128xf32> to vector<128xf32>
    %15 = vector.shape_cast %14 : vector<128xf32> to vector<1x128xf32>
    %16 = arith.addf %12, %15 : vector<1x128xf32>
    %c0_11 = arith.constant 0 : index
    %c0_12 = arith.constant 0 : index
    %17 = vector.load %arg4[%c0_11, %c0_12] : memref<1x128xf32, #tpu.memory_space<vmem>>, vector<1x128xf32>
    tpu.vector_store %arg4[%c0_11, %c0_12], %16 {strides = array<i32>} : memref<1x128xf32, #tpu.memory_space<vmem>>, vector<1x128xf32>,
    return
  }
  func.func @transform_0(%arg0: i32) -> (i32, i32) {
    %c0_i32 = arith.constant 0 : i32
    %c0_i32_0 = arith.constant 0 : i32
    return %arg0, %c0_i32 : i32, i32
  }
  func.func @transform_1(%arg0: i32) -> (i32, i32) {
    %c0_i32 = arith.constant 0 : i32
    %c0_i32_0 = arith.constant 0 : i32
    %c0_i32_1 = arith.constant 0 : i32
    return %c0_i32, %c0_i32_0 : i32, i32
  }
  func.func @transform_2(%arg0: i32) -> (i32, i32) {
    %c0_i32 = arith.constant 0 : i32
    %c0_i32_0 = arith.constant 0 : i32
    %c0_i32_1 = arith.constant 0 : i32
    return %c0_i32, %c0_i32_0 : i32, i32
  }
  func.func @transform_3(%arg0: i32) -> (i32, i32) {
    %c0_i32 = arith.constant 0 : i32
    %c0_i32_0 = arith.constant 0 : i32
    %c0_i32_1 = arith.constant 0 : i32
    return %c0_i32, %c0_i32_0 : i32, i32
  }
}

</mosaic_0001>

<llo_original>
// kernel: tpu_custom_call.1
$region0: #{tpu_custom_call.1}
  #allocation0 [shape = 'u32[]', space=smem, size = 0x4, offset = 0x4, fixed_abs, tag = 'smem constant byte address 0x4 - core index']
  #allocation1 [shape = 'u32[144,128]{1,0:T(1,128)}', space=vmem, size = 0x12000, scoped, tag = 'internal scratch']
  %s0 = inlined_call_operand.hbm [shape: f32[128,128], index: 0, kind: input, shape index: {}]
  %s1 = inlined_call_operand.vmem [shape: f32[1,128], index: 1, kind: input, shape index: {}]
  %s2 = inlined_call_operand.hbm [shape: f32[1,128], index: 2, kind: output, shape index: {0}]
  %s3 = inlined_call_operand.hbm [shape: f32[1,128], index: 3, kind: output, shape index: {1}]
  %4 = xla_tuple %s2, %s3
  %s5 = sld [smem:[#allocation0]]
  $region34: #{tpu_custom_call.1} parent=0
    _
  %s7 = ssub.s32 1, %s5
  %s8 = scalar_select 0, %s7, %s5
  $region1: #{tpu_custom_call.1} parent=0
    #allocation2 [shape = 'u8[65536]{0}', space=vmem, size = 0x10000, scoped, tag = 'input window, operand 0, single buffered']
    #allocation3 [shape = 's32[1]{0}', space=sflag, size = 0x4, scoped, tag = 'scoped memory for tpu_custom_call.1']
    #allocation4 [shape = 's32[1]{0}', space=sflag, size = 0x4, scoped, tag = 'scoped memory for tpu_custom_call.1']
    #allocation5 [shape = 'u8[512]{0}', space=vmem, size = 0x400, scoped, tag = 'output window, operand 0, single buffered']
    #allocation6 [shape = 'u8[512]{0}', space=vmem, size = 0x400, scoped, tag = 'output window, operand 1, single buffered']
    #allocation7 [shape = 's32[1]{0}', space=sflag, size = 0x4, scoped, tag = 'scoped memory for tpu_custom_call.1']
    %9 = vsyncpa [#allocation3], 0
    %10 = vsyncpa [#allocation4], 0
    %11 = vsyncpa [#allocation7], 0
    // Predicated region
    $region2: #{tpu_custom_call.1} parent=1 // pred_check
      _
    $region3: #{tpu_custom_call.1} parent=1 // pred_check_branch
      %13 = sbr.rel (0) target = $region5
    $region4: #{tpu_custom_call.1} parent=1 // pred_region
      %s15 = ssub.s32 2048, 2048
      %16 = vsyncadd [#allocation3], %s15
      %s17 = sshll.u32 [#allocation2], 4
      %s18 = int_to_ptr.vmem [resolvable:$true] %s17
      %23 = dma.hbm_to_vmem [thread:$0]  %s0, 2048, %s18, [#allocation3], 128, 128, 8
    $region5: #{tpu_custom_call.1} parent=1 // pred_fallthru
      _
    // Predicated region
    $region6: #{tpu_custom_call.1} parent=1 // pred_check
      _
    $region7: #{tpu_custom_call.1} parent=1 // pred_check_branch
      %25 = sbr.rel (0) target = $region9
    $region8: #{tpu_custom_call.1} parent=1 // pred_region
      _
    $region9: #{tpu_custom_call.1} parent=1 // pred_fallthru
      _
    // Predicated region
    $region10: #{tpu_custom_call.1} parent=1 // pred_check
      _
    $region11: #{tpu_custom_call.1} parent=1 // pred_check_branch
      %27 = sbr.rel (0) target = $region13
    $region12: #{tpu_custom_call.1} parent=1 // pred_region
      %28 = dma.done [#allocation3], 2048
    $region13: #{tpu_custom_call.1} parent=1 // pred_fallthru
      _
    %p29 = scmp.eq.s32.totalorder 0, 0
    // Predicated region
    $region14: #{tpu_custom_call.1} parent=1 // pred_check
      %p30 = pneg %p29
    $region15: #{tpu_custom_call.1} parent=1 // pred_check_branch
      %32 = sbr.rel (%p30) target = $region17
    $region16: #{tpu_custom_call.1} parent=1 // pred_region
      %33 = vst [vmem:[#allocation5] sm:$0x1] 0.0
      %34 = vst [vmem:[#allocation6] sm:$0x1] 0.0
    $region17: #{tpu_custom_call.1} parent=1 // pred_fallthru
      _
    %v35 = vld [vmem:[#allocation2] sm:$0xff]
    %v36 = vld [vmem:[#allocation2 + $0x8] sm:$0xff]
    %v37 = vld [vmem:[#allocation2 + $0x10] sm:$0xff]
    %v38 = vld [vmem:[#allocation2 + $0x18] sm:$0xff]
    %v39 = vld [vmem:[#allocation2 + $0x20] sm:$0xff]
    %v40 = vld [vmem:[#allocation2 + $0x28] sm:$0xff]
    %v41 = vld [vmem:[#allocation2 + $0x30] sm:$0xff]
    %v42 = vld [vmem:[#allocation2 + $0x38] sm:$0xff]
    %v43 = vld [vmem:[#allocation2 + $0x40] sm:$0xff]
    %v44 = vld [vmem:[#allocation2 + $0x48] sm:$0xff]
    %v45 = vld [vmem:[#allocation2 + $0x50] sm:$0xff]
    %v46 = vld [vmem:[#allocation2 + $0x58] sm:$0xff]
    %v47 = vld [vmem:[#allocation2 + $0x60] sm:$0xff]
    %v48 = vld [vmem:[#allocation2 + $0x68] sm:$0xff]
    %v49 = vld [vmem:[#allocation2 + $0x70] sm:$0xff]
    %v50 = vld [vmem:[#allocation2 + $0x78] sm:$0xff]
    %v51 = vld [vmem:[%s1] sm:$0x1]
    %v53 = vlaneseq
    %v54 = vshrl.u32 %v53, 7
    %v55 = vsub.s32 0, %v54
    %v56 = vrot.slane %v51, %v55
    %v58 = vsub.f32 %v35, %v56
    %v59 = vsub.f32 %v36, %v56
    %v60 = vsub.f32 %v37, %v56
    %v61 = vsub.f32 %v38, %v56
    %v62 = vsub.f32 %v39, %v56
    %v63 = vsub.f32 %v40, %v56
    %v64 = vsub.f32 %v41, %v56
    %v65 = vsub.f32 %v42, %v56
    %v66 = vsub.f32 %v43, %v56
    %v67 = vsub.f32 %v44, %v56
    %v68 = vsub.f32 %v45, %v56
    %v69 = vsub.f32 %v46, %v56
    %v70 = vsub.f32 %v47, %v56
    %v71 = vsub.f32 %v48, %v56
    %v72 = vsub.f32 %v49, %v56
    %v73 = vsub.f32 %v50, %v56
    %v74 = vld [vmem:[#allocation5] sm:$0x1]
    %v75 = vadd.f32 %v58, %v59
    %v76 = vadd.f32 %v75, %v60
    %v77 = vadd.f32 %v76, %v61
    %v78 = vadd.f32 %v77, %v62
    %v79 = vadd.f32 %v78, %v63
    %v80 = vadd.f32 %v79, %v64
    %v81 = vadd.f32 %v80, %v65
    %v82 = vadd.f32 %v81, %v66
    %v83 = vadd.f32 %v82, %v67
    %v84 = vadd.f32 %v83, %v68
    %v85 = vadd.f32 %v84, %v69
    %v86 = vadd.f32 %v85, %v70
    %v87 = vadd.f32 %v86, %v71
    %v88 = vadd.f32 %v87, %v72
    %v89 = vadd.f32 %v88, %v73
    %v90 = vrot.slane %v89, 4
    %v91 = vadd.f32 %v89, %v90
    %v92 = vrot.slane %v91, 2
    %v93 = vadd.f32 %v91, %v92
    %v94 = vrot.slane %v93, 1
    %v95 = vadd.f32 %v93, %v94
    %v96 = vadd.f32 %v74, %v95
    %97 = vst [vmem:[#allocation5] sm:$0x1] %v96
    %v98 = vld [vmem:[#allocation6] sm:$0x1]
    %v99 = vmul.f32 %v58, %v58
    %v100 = vmul.f32 %v59, %v59
    %v101 = vmul.f32 %v60, %v60
    %v102 = vmul.f32 %v61, %v61
    %v103 = vmul.f32 %v62, %v62
    %v104 = vmul.f32 %v63, %v63
    %v105 = vmul.f32 %v64, %v64
    %v106 = vmul.f32 %v65, %v65
    %v107 = vmul.f32 %v66, %v66
    %v108 = vmul.f32 %v67, %v67
    %v109 = vmul.f32 %v68, %v68
    %v110 = vmul.f32 %v69, %v69
    %v111 = vmul.f32 %v70, %v70
    %v112 = vmul.f32 %v71, %v71
    %v113 = vmul.f32 %v72, %v72
    %v114 = vmul.f32 %v73, %v73
    %v115 = vadd.f32 %v99, %v100
    %v116 = vadd.f32 %v115, %v101
    %v117 = vadd.f32 %v116, %v102
    %v118 = vadd.f32 %v117, %v103
    %v119 = vadd.f32 %v118, %v104
    %v120 = vadd.f32 %v119, %v105
    %v121 = vadd.f32 %v120, %v106
    %v122 = vadd.f32 %v121, %v107
    %v123 = vadd.f32 %v122, %v108
    %v124 = vadd.f32 %v123, %v109
    %v125 = vadd.f32 %v124, %v110
    %v126 = vadd.f32 %v125, %v111
    %v127 = vadd.f32 %v126, %v112
    %v128 = vadd.f32 %v127, %v113
    %v129 = vadd.f32 %v128, %v114
    %v130 = vrot.slane %v129, 4
    %v131 = vadd.f32 %v129, %v130
    %v132 = vrot.slane %v131, 2
    %v133 = vadd.f32 %v131, %v132
    %v134 = vrot.slane %v133, 1
    %v135 = vadd.f32 %v133, %v134
    %v136 = vadd.f32 %v98, %v135
    %137 = vst [vmem:[#allocation6] sm:$0x1] %v136
    // Predicated region
    $region18: #{tpu_custom_call.1} parent=1 // pred_check
      _
    $region19: #{tpu_custom_call.1} parent=1 // pred_check_branch
      %139 = sbr.rel (0) target = $region21
    $region20: #{tpu_custom_call.1} parent=1 // pred_region
      %s141 = ssub.s32 16, 16
      %142 = vsyncadd [#allocation4], %s141
      %s144 = sshll.u32 [#allocation5], 4
      %s145 = int_to_ptr.vmem [resolvable:$true] %s144
      %147 = dma.vmem_to_hbm [thread:$0]  %s145, 16, %s2, [#allocation4]
    $region21: #{tpu_custom_call.1} parent=1 // pred_fallthru
      _
    // Predicated region
    $region22: #{tpu_custom_call.1} parent=1 // pred_check
      _
    $region23: #{tpu_custom_call.1} parent=1 // pred_check_branch
      %149 = sbr.rel (0) target = $region25
    $region24: #{tpu_custom_call.1} parent=1 // pred_region
      %s151 = ssub.s32 16, 16
      %152 = vsyncadd [#allocation7], %s151
      %s154 = sshll.u32 [#allocation6], 4
      %s155 = int_to_ptr.vmem [resolvable:$true] %s154
      %157 = dma.vmem_to_hbm [thread:$0]  %s155, 16, %s3, [#allocation7]
    $region25: #{tpu_custom_call.1} parent=1 // pred_fallthru
      _
    // Predicated region
    $region26: #{tpu_custom_call.1} parent=1 // pred_check
      _
    $region27: #{tpu_custom_call.1} parent=1 // pred_check_branch
      %159 = sbr.rel (0) target = $region29
    $region28: #{tpu_custom_call.1} parent=1 // pred_region
      %160 = dma.done [#allocation4], 16
    $region29: #{tpu_custom_call.1} parent=1 // pred_fallthru
      _
    // Predicated region
    $region30: #{tpu_custom_call.1} parent=1 // pred_check
      _
    $region31: #{tpu_custom_call.1} parent=1 // pred_check_branch
      %162 = sbr.rel (0) target = $region33
    $region32: #{tpu_custom_call.1} parent=1 // pred_region
      %163 = dma.done [#allocation7], 16
    $region33: #{tpu_custom_call.1} parent=1 // pred_fallthru
      _
    %164 = vsyncpa [#allocation3], 1
    %165 = vsyncpa [#allocation4], 1
    %166 = vsyncpa [#allocation7], 1

</llo_original>
